<compile_context>
chip_gen: v7x
topology: tpu7x:2x2x1
jax: 0.10.0
libtpu: 0.0.40
codegen_flags: <defaults>
</compile_context>

<pallas_src>
import functools

import numpy as np
import jax
import jax.numpy as jnp
from jax import lax
from jax.experimental import pallas as pl
from jax.experimental.pallas import tpu as pltpu

_SQRT1_2 = 0.7071067811865476


# ----------------------------------------------------------------------------
# Small in-kernel helpers (fp32 elementwise math)
# ----------------------------------------------------------------------------
def _gelu_erf(x):
    # exact (erf) GELU, matching torch.nn.GELU() default
    return 0.5 * x * (1.0 + lax.erf(x * _SQRT1_2))


def _ln(x, g, b, eps=1e-5):
    mu = jnp.mean(x, axis=-1, keepdims=True)
    xc = x - mu
    var = jnp.mean(xc * xc, axis=-1, keepdims=True)
    return xc * lax.rsqrt(var + eps) * g + b


def _vmem_limit(est_bytes):
    # explicit, size-derived scoped-VMEM request; 48 MiB cap is safe on v7x (64 MiB/TC)
    return int(min(max(est_bytes, 32 * 1024 * 1024), 48 * 1024 * 1024))


# ----------------------------------------------------------------------------
# Fused patch-embedding kernel: im2col-matmul + bias + LayerNorm
# ----------------------------------------------------------------------------
def _embed_kernel(x_ref, w_ref, b_ref, g_ref, bb_ref, o_ref):
    acc = jnp.dot(x_ref[...], w_ref[...], preferred_element_type=jnp.float32)
    acc = acc + b_ref[...]
    o_ref[...] = _ln(acc, g_ref[...], bb_ref[...]).astype(o_ref.dtype)


def embed_ln(cols_bf16, w_bf16, b, g, beta, *, tile_m=512):
    """(M, K) bf16 @ (K, E) bf16 + bias, then LayerNorm over E.  Tiled over rows."""
    M, K = cols_bf16.shape
    _, N = w_bf16.shape
    tm = M if M <= tile_m else tile_m
    est = 2 * (tm * K + K * N) * 2 + 2 * tm * N * 4 + (2 << 20)
    return pl.pallas_call(
        _embed_kernel,
        out_shape=jax.ShapeDtypeStruct((M, N), jnp.float32),
        grid=(pl.cdiv(M, tm),),
        in_specs=[
            pl.BlockSpec((tm, K), lambda i: (i, 0)),
            pl.BlockSpec((K, N), lambda i: (0, 0)),
            pl.BlockSpec((1, N), lambda i: (0, 0)),
            pl.BlockSpec((1, N), lambda i: (0, 0)),
            pl.BlockSpec((1, N), lambda i: (0, 0)),
        ],
        out_specs=pl.BlockSpec((tm, N), lambda i: (i, 0)),
        compiler_params=pltpu.CompilerParams(
            dimension_semantics=("parallel",),
            vmem_limit_bytes=_vmem_limit(est),
        ),
    )(cols_bf16, w_bf16, b, g, beta)


# ----------------------------------------------------------------------------
# Depth-fused transformer-Block kernel
#   grid = (batch_blocks, depth); the output block (same index across depth) carries the
#   fp32 residual stream in VMEM; per-layer weights are indexed by the depth grid step.
# ----------------------------------------------------------------------------
def _blocks_kernel(x_ref, ln1g_ref, ln1b_ref, convw_ref, convb_ref,
                   ln2g_ref, ln2b_ref, fc1w_ref, fc1b_ref, fc2w_ref, fc2b_ref,
                   o_ref, *, T, Htok, Wtok, num_heads):
    layer = pl.program_id(1)

    @pl.when(layer == 0)
    def _():
        o_ref[...] = x_ref[...]          # seed the carried residual stream

    x = o_ref[...]                       # (rows, C) fp32, resident in VMEM across depth
    rows, C = x.shape
    bb = rows // T                       # images folded into this grid step
    d = C // num_heads

    # ---- LN1 (prologue of the qkv conv)
    xn = _ln(x, ln1g_ref[...], ln1b_ref[...])

    # token (row, col) coordinates for the 3x3 tap validity mask (built in-kernel, no side input)
    r = lax.broadcasted_iota(jnp.int32, (rows, 1), 0)
    t = r % T
    th = t // Wtok
    tw = t - th * Wtok

    # ---- 3x3 conv (+ folded BatchNorm) on the (Htok, Wtok) token grid:
    #      9 rolled-and-masked (rows, C) @ (C, C) bf16 MXU matmuls.  The roll wraps across
    #      image boundaries but every wrapped row is zeroed by the validity mask.
    acc = jnp.zeros((rows, C), jnp.float32)
    for kh in range(3):
        for kw in range(3):
            dh, dw = kh - 1, kw - 1
            off = dh * Wtok + dw                                   # row-major token offset
            shifted = xn if off == 0 else pltpu.roll(xn, (-off) % rows, axis=0)
            valid = ((th + dh >= 0) & (th + dh < Htok) &
                     (tw + dw >= 0) & (tw + dw < Wtok))
            tap = jnp.where(valid, shifted, 0.0)
            acc = acc + jnp.dot(tap.astype(jnp.bfloat16), convw_ref[kh * 3 + kw],
                                preferred_element_type=jnp.float32)
    qkv = acc + convb_ref[...]           # q == k == v; channels already in '(H d)' order

    # ---- multi-head self-attention (per image), scale = 1/sqrt(num_heads) as in the reference.
    #      Head permutation is folded into the conv weights, so each head is a static lane slice
    #      and the per-head output lands directly at its merged '(H d)' position.
    scale = 1.0 / (num_heads ** 0.5)
    img_outs = []
    for b in range(bb):
        qb = qkv[b * T:(b + 1) * T, :]
        head_outs = []
        for h in range(num_heads):
            qh = qb[:, h * d:(h + 1) * d].astype(jnp.bfloat16)     # (T, d); q == k == v
            s = lax.dot_general(qh, qh, (((1,), (1,)), ((), ())),
                                preferred_element_type=jnp.float32) * scale
            s = s - jnp.max(s, axis=-1, keepdims=True)
            p = jnp.exp(s)
            p = p / jnp.sum(p, axis=-1, keepdims=True)             # exact softmax
            head_outs.append(jnp.dot(p.astype(jnp.bfloat16), qh,
                                     preferred_element_type=jnp.float32))
        img_outs.append(jnp.concatenate(head_outs, axis=-1))       # (T, C) merged '(H d)'
    attn = img_outs[0] if bb == 1 else jnp.concatenate(img_outs, axis=0)

    x = x + attn                          # residual (dropout = identity in eval)

    # ---- LN2 + MLP (Linear -> GELU -> Linear), dropouts are identity in eval
    hn = _ln(x, ln2g_ref[...], ln2b_ref[...])
    h1 = jnp.dot(hn.astype(jnp.bfloat16), fc1w_ref[...],
                 preferred_element_type=jnp.float32) + fc1b_ref[...]
    h1 = _gelu_erf(h1)
    h2 = jnp.dot(h1.astype(jnp.bfloat16), fc2w_ref[...],
                 preferred_element_type=jnp.float32) + fc2b_ref[...]
    o_ref[...] = (x + h2).astype(o_ref.dtype)


def cvt_blocks(tokens, blk, *, depth, T, Htok, Wtok, num_heads, bb):
    """Run all `depth` Blocks on (B*T, C) tokens in one fused pallas_call."""
    Mtot, C = tokens.shape
    rows = bb * T
    nb = Mtot // rows
    hid = blk["fc1_w"].shape[-1]

    xmap = lambda b, l: (b, 0)
    wmap3 = lambda b, l: (l, 0, 0)
    wmap4 = lambda b, l: (l, 0, 0, 0)

    weight_bytes = (9 * C * C + C * hid + hid * C) * 2 + (7 * C + hid) * 4
    est = 2 * 2 * weight_bytes + 4 * rows * C * 4 + 2 * rows * hid * 4 + (2 << 20)

    kernel = functools.partial(_blocks_kernel, T=T, Htok=Htok, Wtok=Wtok,
                               num_heads=num_heads)
    return pl.pallas_call(
        kernel,
        out_shape=jax.ShapeDtypeStruct((Mtot, C), jnp.float32),
        grid=(nb, depth),
        in_specs=[
            pl.BlockSpec((rows, C), xmap),            # tokens (read only at depth==0)
            pl.BlockSpec((None, 1, C), wmap3),        # ln1 gamma
            pl.BlockSpec((None, 1, C), wmap3),        # ln1 beta
            pl.BlockSpec((None, 9, C, C), wmap4),     # conv taps (bf16, BN + head-perm folded)
            pl.BlockSpec((None, 1, C), wmap3),        # conv bias (BN + head-perm folded)
            pl.BlockSpec((None, 1, C), wmap3),        # ln2 gamma
            pl.BlockSpec((None, 1, C), wmap3),        # ln2 beta
            pl.BlockSpec((None, C, hid), wmap3),      # fc1 weight (bf16)
            pl.BlockSpec((None, 1, hid), wmap3),      # fc1 bias
            pl.BlockSpec((None, hid, C), wmap3),      # fc2 weight (bf16)
            pl.BlockSpec((None, 1, C), wmap3),        # fc2 bias
        ],
        out_specs=pl.BlockSpec((rows, C), xmap),      # resident across depth (carried state)
        compiler_params=pltpu.CompilerParams(
            dimension_semantics=("parallel", "arbitrary"),
            vmem_limit_bytes=_vmem_limit(est),
        ),
    )(tokens, blk["ln1_g"], blk["ln1_b"], blk["conv_w"], blk["conv_b"],
      blk["ln2_g"], blk["ln2_b"], blk["fc1_w"], blk["fc1_b"], blk["fc2_w"], blk["fc2_b"])


# ----------------------------------------------------------------------------
# Plain-JAX glue: patch im2col (stride == patch, no inflation), batch tiling, params
# ----------------------------------------------------------------------------
def im2col(x, ksize, stride, padding):
    """x: (B, C, H, W) -> (B*Ho*Wo, C*k*k), column order (c, kh, kw) to match PyTorch
    Conv2d weight layout (Cout, Cin, kH, kW) flattened over (Cin, kH, kW)."""
    B, C, H, W = x.shape
    xp = jnp.pad(x, ((0, 0), (0, 0), (padding, padding), (padding, padding)))
    Hp, Wp = H + 2 * padding, W + 2 * padding
    Ho = (Hp - ksize) // stride + 1
    Wo = (Wp - ksize) // stride + 1
    patches = []
    for kh in range(ksize):
        for kw in range(ksize):
            patches.append(xp[:, :, kh:kh + stride * Ho:stride, kw:kw + stride * Wo:stride])
    cols = jnp.stack(patches, axis=2)                # (B, C, k*k, Ho, Wo)
    cols = jnp.transpose(cols, (0, 3, 4, 1, 2))      # (B, Ho, Wo, C, k*k)
    return cols.reshape(B * Ho * Wo, C * ksize * ksize), Ho, Wo


def _pick_bb(B, T):
    """Images per block-kernel grid step: aim for many rows per step (fill the MXU M dim,
    amortise per-step overhead) while keeping >=2 'parallel' steps when possible (v7x has
    2 TensorCores) and a bounded per-step footprint."""
    divs = [d for d in range(1, B + 1) if B % d == 0 and (d * T) % 8 == 0]
    if not divs:
        return B                                      # full-batch block (block == full dim)
    fits = [d for d in divs if d * T <= 512] or [min(divs)]
    bb = max(fits)
    alt = [d for d in fits if B // d >= 2 and d * T >= 128]
    if B // bb < 2 and alt:                           # keep both v7x TensorCores busy
        bb = max(alt)
    return bb


def vit_forward(x, params, *, patch_size, stride, padding, num_heads, depth):
    """VisionTransformer.forward with cls_token=False, use_coarse_labels=False, ch_out=False."""
    B = x.shape[0]
    E = params["embed_w"].shape[1]
    # conv_embedd: Conv2d -> 'b c h w -> b (h w) c' -> LayerNorm (fused matmul+bias+LN kernel)
    cols, Ho, Wo = im2col(x, patch_size, stride, padding)
    assert Ho == Wo, "multi_head_attention in the reference assumes a square token grid"
    T = Ho * Wo
    emb = embed_ln(cols.astype(jnp.bfloat16), params["embed_w"], params["embed_b"],
                   params["embed_ln_g"], params["embed_ln_b"])        # (B*T, E) fp32
    bb = _pick_bb(B, T)
    tokens = cvt_blocks(emb, params["blocks"], depth=depth, T=T,
                        Htok=Ho, Wtok=Wo, num_heads=num_heads, bb=bb)  # (B*T, E)
    # 'b (h w) c -> b c h w'
    return jnp.transpose(tokens.reshape(B, T, E), (0, 2, 1)).reshape(B, E, Ho, Wo)


def init_params(key, *, in_ch, embed_dim, num_heads, patch_size, depth):
    E = embed_dim
    assert E % num_heads == 0
    d = E // num_heads
    keys = jax.random.split(key, 1 + depth)

    def nrm(k, shape, scale=0.02):
        return scale * jax.random.normal(k, shape, jnp.float32)

    k0 = jax.random.split(keys[0], 2)
    params = {
        "embed_w": nrm(k0[0], (in_ch * patch_size * patch_size, E)).astype(jnp.bfloat16),
        "embed_b": nrm(k0[1], (1, E)),
        "embed_ln_g": jnp.ones((1, E), jnp.float32),
        "embed_ln_b": jnp.zeros((1, E), jnp.float32),
    }

    # '(d H) -> (H d)' head split/merge folded into the qkv-conv output channels:
    # new channel j = h*d + di reads old channel di*num_heads + h.
    perm = np.array([di * num_heads + h for h in range(num_heads) for di in range(d)],
                    dtype=np.int32)

    ln1_g, ln1_b, conv_w, conv_b = [], [], [], []
    ln2_g, ln2_b = [], []
    fc1_w, fc1_b, fc2_w, fc2_b = [], [], [], []
    for i in range(depth):
        bk = jax.random.split(keys[1 + i], 6)
        w = nrm(bk[0], (E, E, 3, 3))                  # (Cout, Cin, kH, kW), PyTorch layout
        b = nrm(bk[1], (E,))
        # BatchNorm2d (eval, PyTorch init defaults): gamma=1, beta=0, mean=0, var=1, eps=1e-5.
        bn_g = jnp.ones((E,)); bn_b = jnp.zeros((E,))
        bn_m = jnp.zeros((E,)); bn_v = jnp.ones((E,))
        s = bn_g / jnp.sqrt(bn_v + 1e-5)
        w_f = w * s[:, None, None, None]
        b_f = (b - bn_m) * s + bn_b
        # (Cout, Cin, kH, kW) -> (kH*kW, Cin, Cout); then permute Cout into head-major order.
        w_t = jnp.transpose(w_f, (2, 3, 1, 0)).reshape(9, E, E)[:, :, perm]
        conv_w.append(w_t.astype(jnp.bfloat16))
        conv_b.append(b_f[perm].reshape(1, E))
        ln1_g.append(jnp.ones((1, E), jnp.float32)); ln1_b.append(jnp.zeros((1, E), jnp.float32))
        ln2_g.append(jnp.ones((1, E), jnp.float32)); ln2_b.append(jnp.zeros((1, E), jnp.float32))
        fc1_w.append(nrm(bk[2], (E, 4 * E)).astype(jnp.bfloat16))
        fc1_b.append(nrm(bk[3], (1, 4 * E)))
        fc2_w.append(nrm(bk[4], (4 * E, E)).astype(jnp.bfloat16))
        fc2_b.append(nrm(bk[5], (1, E)))

    params["blocks"] = {
        "ln1_g": jnp.stack(ln1_g), "ln1_b": jnp.stack(ln1_b),
        "conv_w": jnp.stack(conv_w), "conv_b": jnp.stack(conv_b),
        "ln2_g": jnp.stack(ln2_g), "ln2_b": jnp.stack(ln2_b),
        "fc1_w": jnp.stack(fc1_w), "fc1_b": jnp.stack(fc1_b),
        "fc2_w": jnp.stack(fc2_w), "fc2_b": jnp.stack(fc2_b),
    }
    return params


# ----------------------------------------------------------------------------
if __name__ == "__main__":
    # Small config consistent with the module:
    #   depth=2, embed_dim=32, num_heads=4, patch_size=4, stride=4, padding=0, in_ch=3
    B, in_ch, Himg, Wimg = 2, 3, 16, 16
    depth, embed_dim, num_heads = 2, 32, 4
    patch_size, stride, padding = 4, 4, 0

    x = jax.random.normal(jax.random.PRNGKey(0), (B, in_ch, Himg, Wimg), jnp.float32)
    params = init_params(jax.random.PRNGKey(42), in_ch=in_ch, embed_dim=embed_dim,
                         num_heads=num_heads, patch_size=patch_size, depth=depth)

    out = vit_forward(x, params, patch_size=patch_size, stride=stride, padding=padding,
                      num_heads=num_heads, depth=depth)
    out = jax.block_until_ready(out)

    h_out = (Himg + 2 * padding - patch_size) // stride + 1
    w_out = (Wimg + 2 * padding - patch_size) // stride + 1
    assert out.shape == (B, embed_dim, h_out, w_out), out.shape
    assert bool(jnp.all(jnp.isfinite(out)))
    print("KERNEL_OK")
</pallas_src>

<mosaic_0001>
module attributes {stable_mosaic.version = 11 : i64} {
  func.func @_embed_kernel(%arg0: i32, %arg1: memref<32x48xbf16, #tpu.memory_space<vmem>>, %arg2: memref<48x32xbf16, #tpu.memory_space<vmem>>, %arg3: memref<1x32xf32, #tpu.memory_space<vmem>>, %arg4: memref<1x32xf32, #tpu.memory_space<vmem>>, %arg5: memref<1x32xf32, #tpu.memory_space<vmem>>, %arg6: memref<32x32xf32, #tpu.memory_space<vmem>>) attributes {dimension_semantics = [#tpu.dimension_semantics<parallel>], iteration_bounds = array<i64: 1>, scalar_prefetch = 0 : i64, scratch_operands = 0 : i64, tpu.core_type = #tpu.core_type<tc>, window_params = [{transform_indices = @transform_0, window_bounds = array<i64: 32, 48>}, {pipeline_mode = #tpu.pipeline_mode<synchronous>, transform_indices = @transform_1, window_bounds = array<i64: 48, 32>}, {pipeline_mode = #tpu.pipeline_mode<synchronous>, transform_indices = @transform_2, window_bounds = array<i64: 1, 32>}, {pipeline_mode = #tpu.pipeline_mode<synchronous>, transform_indices = @transform_3, window_bounds = array<i64: 1, 32>}, {pipeline_mode = #tpu.pipeline_mode<synchronous>, transform_indices = @transform_4, window_bounds = array<i64: 1, 32>}, {transform_indices = @transform_5, window_bounds = array<i64: 32, 32>}]} {
    %c0 = arith.constant 0 : index
    %c0_0 = arith.constant 0 : index
    %0 = vector.load %arg1[%c0, %c0_0] : memref<32x48xbf16, #tpu.memory_space<vmem>>, vector<32x48xbf16>
    %c0_1 = arith.constant 0 : index
    %c0_2 = arith.constant 0 : index
    %1 = vector.load %arg2[%c0_1, %c0_2] : memref<48x32xbf16, #tpu.memory_space<vmem>>, vector<48x32xbf16>
    %cst = arith.constant dense<0.000000e+00> : vector<32x32xf32>
    %2 = tpu.matmul %0, %1, %cst {dimension_numbers = #tpu.dot_dimension_numbers<[1], [0], [0], [1], [0, 0, 1, 1], [], []>} : vector<32x48xbf16>, vector<48x32xbf16>, vector<32x32xf32> -> vector<32x32xf32>
    %c0_3 = arith.constant 0 : index
    %c0_4 = arith.constant 0 : index
    %3 = vector.load %arg3[%c0_3, %c0_4] : memref<1x32xf32, #tpu.memory_space<vmem>>, vector<1x32xf32>
    %4 = vector.broadcast %3 : vector<1x32xf32> to vector<32x32xf32>
    %5 = arith.addf %2, %4 : vector<32x32xf32>
    %c0_5 = arith.constant 0 : index
    %c0_6 = arith.constant 0 : index
    %6 = vector.load %arg4[%c0_5, %c0_6] : memref<1x32xf32, #tpu.memory_space<vmem>>, vector<1x32xf32>
    %c0_7 = arith.constant 0 : index
    %c0_8 = arith.constant 0 : index
    %7 = vector.load %arg5[%c0_7, %c0_8] : memref<1x32xf32, #tpu.memory_space<vmem>>, vector<1x32xf32>
    %cst_9 = arith.constant dense<0.000000e+00> : vector<32xf32>
    %8 = vector.multi_reduction <add>, %5, %cst_9 [1] : vector<32x32xf32> to vector<32xf32>
    %9 = vector.shape_cast %8 : vector<32xf32> to vector<32x1xf32>
    %cst_10 = arith.constant 3.200000e+01 : f32
    %10 = vector.broadcast %cst_10 : f32 to vector<32x1xf32>
    %11 = arith.divf %9, %10 : vector<32x1xf32>
    %12 = vector.broadcast %11 : vector<32x1xf32> to vector<32x32xf32>
    %13 = arith.subf %5, %12 : vector<32x32xf32>
    %14 = arith.mulf %13, %13 : vector<32x32xf32>
    %cst_11 = arith.constant dense<0.000000e+00> : vector<32xf32>
    %15 = vector.multi_reduction <add>, %14, %cst_11 [1] : vector<32x32xf32> to vector<32xf32>
    %16 = vector.shape_cast %15 : vector<32xf32> to vector<32x1xf32>
    %cst_12 = arith.constant 3.200000e+01 : f32
    %17 = vector.broadcast %cst_12 : f32 to vector<32x1xf32>
    %18 = arith.divf %16, %17 : vector<32x1xf32>
    %cst_13 = arith.constant 9.99999974E-6 : f32
    %19 = vector.broadcast %cst_13 : f32 to vector<32x1xf32>
    %20 = arith.addf %18, %19 : vector<32x1xf32>
    %21 = math.rsqrt %20 : vector<32x1xf32>
    %22 = vector.broadcast %21 : vector<32x1xf32> to vector<32x32xf32>
    %23 = arith.mulf %13, %22 : vector<32x32xf32>
    %24 = vector.broadcast %6 : vector<1x32xf32> to vector<32x32xf32>
    %25 = arith.mulf %23, %24 : vector<32x32xf32>
    %26 = vector.broadcast %7 : vector<1x32xf32> to vector<32x32xf32>
    %27 = arith.addf %25, %26 : vector<32x32xf32>
    %c0_14 = arith.constant 0 : index
    %c0_15 = arith.constant 0 : index
    %28 = vector.load %arg6[%c0_14, %c0_15] : memref<32x32xf32, #tpu.memory_space<vmem>>, vector<32x32xf32>
    tpu.vector_store %arg6[%c0_14, %c0_15], %27 {strides = array<i32>} : memref<32x32xf32, #tpu.memory_space<vmem>>, vector<32x32xf32>,
    return
  }
  func.func @transform_0(%arg0: i32) -> (i32, i32) {
    %c0_i32 = arith.constant 0 : i32
    %c0_i32_0 = arith.constant 0 : i32
    return %arg0, %c0_i32 : i32, i32
  }
  func.func @transform_1(%arg0: i32) -> (i32, i32) {
    %c0_i32 = arith.constant 0 : i32
    %c0_i32_0 = arith.constant 0 : i32
    %c0_i32_1 = arith.constant 0 : i32
    return %c0_i32, %c0_i32_0 : i32, i32
  }
  func.func @transform_2(%arg0: i32) -> (i32, i32) {
    %c0_i32 = arith.constant 0 : i32
    %c0_i32_0 = arith.constant 0 : i32
    %c0_i32_1 = arith.constant 0 : i32
    return %c0_i32, %c0_i32_0 : i32, i32
  }
  func.func @transform_3(%arg0: i32) -> (i32, i32) {
    %c0_i32 = arith.constant 0 : i32
    %c0_i32_0 = arith.constant 0 : i32
    %c0_i32_1 = arith.constant 0 : i32
    return %c0_i32, %c0_i32_0 : i32, i32
  }
  func.func @transform_4(%arg0: i32) -> (i32, i32) {
    %c0_i32 = arith.constant 0 : i32
    %c0_i32_0 = arith.constant 0 : i32
    %c0_i32_1 = arith.constant 0 : i32
    return %c0_i32, %c0_i32_0 : i32, i32
  }
  func.func @transform_5(%arg0: i32) -> (i32, i32) {
    %c0_i32 = arith.constant 0 : i32
    %c0_i32_0 = arith.constant 0 : i32
    return %arg0, %c0_i32 : i32, i32
  }
}

</mosaic_0001>

<llo_original>
// kernel: tpu_custom_call.1
$region0: #{tpu_custom_call.1}
  #allocation0 [shape = 'u32[]', space=smem, size = 0x4, offset = 0x4, fixed_abs, tag = 'smem constant byte address 0x4 - core index']
  #allocation1 [shape = 'u32[144,128]{1,0:T(1,128)}', space=vmem, size = 0x12000, scoped, tag = 'internal scratch']
  %s0 = inlined_call_operand.vmem [shape: bf16[32,48], index: 0, kind: input, shape index: {}]
  %s1 = inlined_call_operand.vmem [shape: bf16[48,32], index: 1, kind: input, shape index: {}]
  %s2 = inlined_call_operand.vmem [shape: f32[1,32], index: 2, kind: input, shape index: {}]
  %s3 = inlined_call_operand.vmem [shape: f32[1,32], index: 3, kind: input, shape index: {}]
  %s4 = inlined_call_operand.vmem [shape: f32[1,32], index: 4, kind: input, shape index: {}]
  %s5 = inlined_call_operand.hbm [shape: f32[32,32], index: 5, kind: output, shape index: {}]
  %s6 = sld [smem:[#allocation0]]
  $region30: #{tpu_custom_call.1} parent=0
    _
  %s8 = ssub.s32 1, %s6
  %s9 = scalar_select 0, %s8, %s6
  $region1: #{tpu_custom_call.1} parent=0
    #allocation2 [shape = 'u8[16384]{0}', space=vmem, size = 0x4000, scoped, tag = 'output window, operand 0, single buffered']
    #allocation3 [shape = 's32[1]{0}', space=sflag, size = 0x4, scoped, tag = 'scoped memory for tpu_custom_call.1']
    %10 = vsyncpa [#allocation3], 0
    // Predicated region
    $region2: #{tpu_custom_call.1} parent=1 // pred_check
      _
    $region3: #{tpu_custom_call.1} parent=1 // pred_check_branch
      %12 = sbr.rel (0) target = $region5
    $region4: #{tpu_custom_call.1} parent=1 // pred_region
      _
    $region5: #{tpu_custom_call.1} parent=1 // pred_fallthru
      _
    // Predicated region
    $region6: #{tpu_custom_call.1} parent=1 // pred_check
      _
    $region7: #{tpu_custom_call.1} parent=1 // pred_check_branch
      %14 = sbr.rel (0) target = $region9
    $region8: #{tpu_custom_call.1} parent=1 // pred_region
      _
    $region9: #{tpu_custom_call.1} parent=1 // pred_fallthru
      _
    // Predicated region
    $region10: #{tpu_custom_call.1} parent=1 // pred_check
      _
    $region11: #{tpu_custom_call.1} parent=1 // pred_check_branch
      %16 = sbr.rel (0) target = $region13
    $region12: #{tpu_custom_call.1} parent=1 // pred_region
      _
    $region13: #{tpu_custom_call.1} parent=1 // pred_fallthru
      _
    // Predicated region
    $region14: #{tpu_custom_call.1} parent=1 // pred_check
      _
    $region15: #{tpu_custom_call.1} parent=1 // pred_check_branch
      %18 = sbr.rel (0) target = $region17
    $region16: #{tpu_custom_call.1} parent=1 // pred_region
      _
    $region17: #{tpu_custom_call.1} parent=1 // pred_fallthru
      _
    // Predicated region
    $region18: #{tpu_custom_call.1} parent=1 // pred_check
      _
    $region19: #{tpu_custom_call.1} parent=1 // pred_check_branch
      %20 = sbr.rel (0) target = $region21
    $region20: #{tpu_custom_call.1} parent=1 // pred_region
      _
    $region21: #{tpu_custom_call.1} parent=1 // pred_fallthru
      _
    %v22 = vld [vmem:[%s0] sm:$0xf]
    %v23 = vld [vmem:[%s0 + $0x4] sm:$0xf]
    %v24 = vld [vmem:[%s0 + $0x8] sm:$0xf]
    %v25 = vld [vmem:[%s0 + $0xc] sm:$0xf]
    %v26 = vld [vmem:[%s1] sm:$0xf]
    %v27 = vld [vmem:[%s1 + $0x4] sm:$0xf]
    %v28 = vld [vmem:[%s1 + $0x8] sm:$0xf]
    %v29 = vld [vmem:[%s1 + $0xc] sm:$0xf]
    %v30 = vld [vmem:[%s1 + $0x10] sm:$0xf]
    %v31 = vld [vmem:[%s1 + $0x14] sm:$0xf]
    %v32 = vld [vmem:[%s2] sm:$0x1]
    %v34 = vlaneseq
    %v35 = vshrl.u32 %v34, 7
    %v36 = vsub.s32 0, %v35
    %v37 = vrot.slane %v32, %v36
    %v43 = vunpack.c.l.b16 %v22
    %v44 = vunpack.c.l.b16 %v23
    %v45 = vunpack.c.l.b16 %v24
    %v46 = vunpack.c.l.b16 %v25
    %v47 = vpack.c.b16 %v44, %v43
    %v48 = vpack.c.b16 %v46, %v45
    %v55 = vunpack.c.l.b16 %v26
    %v56 = vunpack.c.l.b16 %v27
    %v57 = vunpack.c.l.b16 %v28
    %v58 = vunpack.c.l.b16 %v29
    %v59 = vunpack.c.l.b16 %v30
    %v60 = vunpack.c.l.b16 %v31
    %v61 = vpack.c.b16 %v56, %v55
    %v62 = vpack.c.b16 %v58, %v57
    %v63 = vpack.c.b16 %v60, %v59
    %vm67 = vcmask 392192
    %v69 = vsel %vm67, %v47, 0
    %v72 = vsel %vm67, %v48, 0
    %74 = vmatprep.subr.bf16.mxu0 0
    %75 = vmatpush1.bf16.msra.mxu0 %v61
    %76 = vmatprep.subr.bf16.mxu0 0
    %77 = vmatpush1.bf16.msra.mxu0 %v62
    %78 = vmatprep.subr.bf16.mxu0 0
    %79 = vmatpush1.bf16.msra.mxu0 %v63
    %80 = vmatprep.subr.bf16.mxu0 0
    %81 = vmatpush1.bf16.msra.mxu0 0
    %82 = vmatprep.subr.bf16.mxu0 0
    %83 = vmatpush1.bf16.msra.mxu0 0
    %84 = vmatprep.subr.bf16.mxu0 0
    %85 = vmatpush1.bf16.msra.mxu0 0
    %86 = vmatprep.subr.bf16.mxu0 0
    %87 = vmatpush1.bf16.msra.mxu0 0
    %88 = vmatprep.subr.bf16.mxu0 0
    %89 = vmatpush1.bf16.msra.mxu0 0
    %90 = vmatprep.subr.bf16.mxu0 0
    %91 = vmatpush1.bf16.msra.mxu0 0
    %92 = vmatprep.subr.bf16.mxu0 0
    %93 = vmatpush1.bf16.msra.mxu0 0
    %94 = vmatprep.subr.bf16.mxu0 0
    %95 = vmatpush1.bf16.msra.mxu0 0
    %96 = vmatprep.subr.bf16.mxu0 0
    %97 = vmatpush1.bf16.msra.mxu0 0
    %98 = vmatprep.subr.bf16.mxu0 0
    %99 = vmatpush1.bf16.msra.mxu0 0
    %100 = vmatprep.subr.bf16.mxu0 0
    %101 = vmatpush1.bf16.msra.mxu0 0
    %102 = vmatprep.subr.bf16.mxu0 0
    %103 = vmatpush1.bf16.msra.mxu0 0
    %104 = vmatprep.subr.bf16.mxu0 0
    %105 = vmatpush1.bf16.msra.mxu0 0
    %106 = vmatprep.mubr.bf16.mxu0 0
    %107 = vmatmul.mubr.bf16.gmra.mrb[0].mxu0 %v69
    %v108 = vpop.f32.mrb[0].mxu0
    %v109 = vadd.f32 %v37, %v108
    %v110 = vpop.f32.mrb[0].mxu0
    %v111 = vpop.f32.mrb[0].mxu0
    %v112 = vadd.f32 %v37, %v111
    %v113 = vpop.f32.mrb[0].mxu0
    %114 = vmatprep.mubr.bf16.mxu0 0
    %115 = vmatmul.mubr.bf16.gmra.mrb[0].mxu0 %v72
    %v116 = vpop.f32.mrb[0].mxu0
    %v117 = vadd.f32 %v37, %v116
    %v118 = vpop.f32.mrb[0].mxu0
    %v119 = vpop.f32.mrb[0].mxu0
    %v120 = vadd.f32 %v37, %v119
    %v121 = vpop.f32.mrb[0].mxu0
    %122 = vdwg.mxu0
    %v123 = vld [vmem:[%s3] sm:$0x1]
    %v124 = vld [vmem:[%s4] sm:$0x1]
    %vm125 = vcmask 261120
    %v126 = vsel %vm125, %v109, 0.0
    %127 = vadd.xlane.f32.xlu0 %v126
    %v128 = vpop.xlane.xlu0 %127
    %v129 = vsel %vm125, %v112, 0.0
    %130 = vadd.xlane.f32.xlu0 %v129
    %v131 = vpop.xlane.xlu0 %130
    %v132 = vsel %vm125, %v117, 0.0
    %133 = vadd.xlane.f32.xlu0 %v132
    %v134 = vpop.xlane.xlu0 %133
    %v135 = vsel %vm125, %v120, 0.0
    %136 = vadd.xlane.f32.xlu0 %v135
    %v137 = vpop.xlane.xlu0 %136
    %v138 = vrcp.pop 32.0
    %v139 = vmul.f32 %v128, %v138
    %v140 = vmul.f32 %v131, %v138
    %v141 = vmul.f32 %v134, %v138
    %v142 = vmul.f32 %v137, %v138
    %v143 = vsub.f32 %v109, %v139
    %v144 = vsub.f32 %v112, %v140
    %v145 = vsub.f32 %v117, %v141
    %v146 = vsub.f32 %v120, %v142
    %v147 = vmul.f32 %v143, %v143
    %v148 = vmul.f32 %v144, %v144
    %v149 = vmul.f32 %v145, %v145
    %v150 = vmul.f32 %v146, %v146
    %v151 = vsel %vm125, %v147, 0.0
    %152 = vadd.xlane.f32.xlu0 %v151
    %v153 = vpop.xlane.xlu0 %152
    %v154 = vsel %vm125, %v148, 0.0
    %155 = vadd.xlane.f32.xlu0 %v154
    %v156 = vpop.xlane.xlu0 %155
    %v157 = vsel %vm125, %v149, 0.0
    %158 = vadd.xlane.f32.xlu0 %v157
    %v159 = vpop.xlane.xlu0 %158
    %v160 = vsel %vm125, %v150, 0.0
    %161 = vadd.xlane.f32.xlu0 %v160
    %v162 = vpop.xlane.xlu0 %161
    %v163 = vmul.f32 %v153, %v138
    %v164 = vmul.f32 %v156, %v138
    %v165 = vmul.f32 %v159, %v138
    %v166 = vmul.f32 %v162, %v138
    %v167 = vadd.f32 %v163, 1e-05
    %v168 = vadd.f32 %v164, 1e-05
    %v169 = vadd.f32 %v165, 1e-05
    %v170 = vadd.f32 %v166, 1e-05
    %v171 = vrsqrt.pop %v167
    %v172 = vrsqrt.pop %v168
    %v173 = vrsqrt.pop %v169
    %v174 = vrsqrt.pop %v170
    %v175 = vmul.f32 %v143, %v171
    %v176 = vmul.f32 %v144, %v172
    %v177 = vmul.f32 %v145, %v173
    %v178 = vmul.f32 %v146, %v174
    %v180 = vlaneseq
    %v181 = vshrl.u32 %v180, 7
    %v182 = vsub.s32 0, %v181
    %v183 = vrot.slane %v123, %v182
    %v185 = vmul.f32 %v175, %v183
    %v186 = vmul.f32 %v176, %v183
    %v187 = vmul.f32 %v177, %v183
    %v188 = vmul.f32 %v178, %v183
    %v190 = vlaneseq
    %v191 = vshrl.u32 %v190, 7
    %v192 = vsub.s32 0, %v191
    %v193 = vrot.slane %v124, %v192
    %v195 = vadd.f32 %v185, %v193
    %v196 = vadd.f32 %v186, %v193
    %v197 = vadd.f32 %v187, %v193
    %v198 = vadd.f32 %v188, %v193
    %199 = vst.msk [vmem:[#allocation2] sm:$0xff] %vm125, %v195
    %200 = vst.msk [vmem:[#allocation2 + $0x8] sm:$0xff] %vm125, %v196
    %201 = vst.msk [vmem:[#allocation2 + $0x10] sm:$0xff] %vm125, %v197
    %202 = vst.msk [vmem:[#allocation2 + $0x18] sm:$0xff] %vm125, %v198
    // Predicated region
    $region22: #{tpu_custom_call.1} parent=1 // pred_check
      _
    $region23: #{tpu_custom_call.1} parent=1 // pred_check_branch
      %204 = sbr.rel (0) target = $region25
    $region24: #{tpu_custom_call.1} parent=1 // pred_region
      %s206 = ssub.s32 512, 512
      %207 = vsyncadd [#allocation3], %s206
      %s208 = sshll.u32 [#allocation2], 4
      %s209 = int_to_ptr.vmem [resolvable:$true] %s208
      %214 = dma.vmem_to_hbm [thread:$0]  %s209, 512, %s5, [#allocation3], 128, 128, 8
    $region25: #{tpu_custom_call.1} parent=1 // pred_fallthru
      _
    // Predicated region
    $region26: #{tpu_custom_call.1} parent=1 // pred_check
      _
    $region27: #{tpu_custom_call.1} parent=1 // pred_check_branch
      %216 = sbr.rel (0) target = $region29
    $region28: #{tpu_custom_call.1} parent=1 // pred_region
      %217 = dma.done [#allocation3], 512
    $region29: #{tpu_custom_call.1} parent=1 // pred_fallthru
      _
    %218 = vsyncpa [#allocation3], 1

</llo_original>
